<compile_context>
chip_gen: v5e
topology: v5e:2x2
jax: 0.10.0
libtpu: 0.0.40
codegen_flags: <defaults>
</compile_context>

<pallas_src>
import functools

import numpy as np
import jax
import jax.numpy as jnp
from jax.experimental import pallas as pl
from jax.experimental.pallas import tpu as pltpu

PI = 3.1415926                      # same constant as the PyTorch `gaussian`
SQRT_2PI = (2.0 * PI) ** 0.5
SQRT_2 = 2.0 ** 0.5


# --------------------------------------------------------------------------- #
# Host-side constant construction (tiny 0/1 expansion matrices)
# --------------------------------------------------------------------------- #
def _pair_matrices(A, K):
    """0/1 matrices that make the pairwise math lane-dense.

    Pair index p = a*A + c  (a = neighbor atom, c = center atom) matches the
    PyTorch .view() flattening order of the output (p*K + k).
    """
    P, F = A * A, A * A * K
    ea = np.zeros((3 * A, 3 * P), np.float32)   # neighbor-atom coord expansion
    ec = np.zeros((3 * A, 3 * P), np.float32)   # center-atom   coord expansion
    s3 = np.zeros((3 * P, P), np.float32)       # sum 3 squared comps -> d^2
    ma = np.zeros((A, P), np.float32)           # neighbor-atom mask expansion
    mc = np.zeros((A, P), np.float32)           # center-atom   mask expansion
    ek = np.zeros((P, F), np.float32)           # pair -> its K gaussian lanes
    for p in range(P):
        a, c = p // A, p % A
        for d in range(3):
            ea[3 * a + d, 3 * p + d] = 1.0
            ec[3 * c + d, 3 * p + d] = 1.0
            s3[3 * p + d, p] = 1.0
        ma[a, p] = 1.0
        mc[c, p] = 1.0
        ek[p, p * K:(p + 1) * K] = 1.0
    return ea, ec, s3, ma, mc, ek


# --------------------------------------------------------------------------- #
# VMEM accounting (padding-aware) and auto-tiling
# --------------------------------------------------------------------------- #
def _round_up(x, m):
    return ((x + m - 1) // m) * m


def _blk_bytes(rows, cols, *, bpe=4):
    """VMEM bytes of one buffered 2D block, including (sublane, 128) padding."""
    sub = 8 * (4 // bpe)            # f32 -> 8, bf16 -> 16, int8 -> 32
    return _round_up(max(rows, 1), sub) * _round_up(max(cols, 1), 128) * bpe


def _vmem_estimate(L, N, tl, A, K, out_bpe):
    """Per-grid-step VMEM working-set estimate (bytes), tile-padding aware."""
    P = A * A
    P3 = 3 * P
    F = P * K
    R = tl * N
    # double-buffered input blocks
    io = 2 * (_blk_bytes(L, 5 * P)          # src_fused  (125 lanes)
              + _blk_bytes(tl, P3)          # xc_ec
              + _blk_bytes(R, 2))           # rows (E_idx | mask_attend)
    io += 2 * _blk_bytes(R, F, bpe=out_bpe)  # output block
    consts = 2 * (_blk_bytes(P3, P) + _blk_bytes(2, P)
                  + _blk_bytes(P, F) + _blk_bytes(3, F))
    interm = (_blk_bytes(R, L)              # neighbor one-hot
              + _blk_bytes(R, tl)           # center one-hot
              + 5 * _blk_bytes(R, 128)      # g / diff / d / m_pair / val
              + 3 * _blk_bytes(R, F))       # x400 / t / out (f32 compute)
    return io + consts + interm + (1 << 20)  # +1 MiB compiler scratch slack


def _tile_ok(L, N, tl, out_bpe):
    """Legality of a residue tile w.r.t. the (sublane, 128) BlockSpec rules."""
    if L % tl != 0:
        return False
    if tl == L:
        return True                          # block == full array dim is always legal
    sub_out = {4: 8, 2: 16, 1: 32}.get(out_bpe, 8)
    return (tl % 8 == 0) and ((tl * N) % sub_out == 0)


def _auto_tile(B, L, N, A, K, budget_bytes, out_bpe):
    """Largest legal residue tile whose padded working set fits the budget.

    Prefers tiles that yield >= 2 grid steps so both v7x TensorCores are fed
    (costless on single-TC v5e/v6e).
    """
    cands = [d for d in range(L, 0, -1) if _tile_ok(L, N, d, out_bpe)]
    fitting = [d for d in cands
               if _vmem_estimate(L, N, d, A, K, out_bpe) <= budget_bytes]
    if not fitting:
        tl = cands[-1]                       # smallest legal tile; best effort
    else:
        multi = [d for d in fitting if B * (L // d) >= 2]
        tl = multi[0] if multi else fitting[0]
    return tl, _vmem_estimate(L, N, tl, A, K, out_bpe)


def _vmem_capacity_bytes():
    try:
        info = pltpu.get_tpu_info()
        cap = getattr(info, "vmem_capacity_bytes", None)
        if cap:
            return int(cap)
    except Exception:
        pass
    return 64 * 1024 * 1024                  # conservative (v7x) fallback


# --------------------------------------------------------------------------- #
# Kernel
# --------------------------------------------------------------------------- #
def _gbf_kernel(src_ref, xc_ref, rows_ref, s3_ref, aff_ref, ek_ref, gc_ref,
                out_ref, *, gather_dtype):
    # src_ref : (1, L, 125)  fused gather source per residue: [X@ea | m@ma | m@mc]
    # xc_ref  : (1, tl, 75)  center-atom coords expanded to pair space (X@ec)
    # rows_ref: (1, R, 2)    per (residue, neighbor) row: [E_idx (as f32), mask_attend]
    # s3_ref  : (3P, P)      triple-sum (squared comps -> squared distance)
    # aff_ref : (2, P)       [mul ; bias] per edge type
    # ek_ref  : (P, F)       pair -> its K gaussian lanes
    # gc_ref  : (3, F)       [mean ; 1/(sqrt(2)*std) ; 1/(sqrt(2*pi)*std)] tiled to F
    # out_ref : (1, R, F)
    L = src_ref.shape[1]
    tl = xc_ref.shape[1]
    R = rows_ref.shape[1]
    N = R // tl
    P3 = xc_ref.shape[2]                 # 3 * A * A
    P = s3_ref.shape[1]                  # A * A

    src = src_ref[0]                     # (L, 125)
    xc = xc_ref[0]                       # (tl, 75)
    rows = rows_ref[0]                   # (R, 2)

    eidx = rows[:, 0:1].astype(jnp.int32)   # exact: values < 2^24 stored as f32
    m_att = rows[:, 1:2]                    # (R, 1)

    # ---- neighbor gather fused with all pair expansions: one MXU pass -------
    lane = jax.lax.broadcasted_iota(jnp.int32, (R, L), 1)
    oh_nbr = (eidx == lane).astype(gather_dtype)                          # (R, L)
    g = jnp.dot(oh_nbr, src.astype(gather_dtype),
                preferred_element_type=jnp.float32)                       # (R, 125)

    # ---- expand center coords (per residue) to R rows via a tiny one-hot ----
    ridx = jax.lax.broadcasted_iota(jnp.int32, (R, tl), 0)
    cstart = jax.lax.broadcasted_iota(jnp.int32, (R, tl), 1) * N
    oh_ctr = ((ridx >= cstart) & (ridx < cstart + N)).astype(gather_dtype)  # (R, tl)
    xc_rows = jnp.dot(oh_ctr, xc.astype(gather_dtype),
                      preferred_element_type=jnp.float32)                 # (R, 75)

    # ---- all A*A pair distances, affine + atom mask at 25-lane width --------
    diff = g[:, :P3] - xc_rows                                            # (R, 75)
    d = jnp.sqrt(jnp.dot(diff * diff, s3_ref[...],
                         preferred_element_type=jnp.float32))             # (R, 25)
    # both pair-mask factors come from the *neighbor* residue (as in torch)
    m_pair = g[:, P3:P3 + P] * g[:, P3 + P:P3 + 2 * P]                    # (R, 25)

    aff = aff_ref[...]
    val = (aff[0:1, :] * d + aff[1:2, :]) * m_pair                        # (R, 25)

    # ---- expand pairs to K lanes -> dense (R, F) gaussian on VPU/EUP --------
    x = jnp.dot(val, ek_ref[...], preferred_element_type=jnp.float32)     # (R, F)
    gc = gc_ref[...]
    t = (x - gc[0:1, :]) * gc[1:2, :]          # -0.5 folded into 1/(sqrt(2)*std)
    out = jnp.exp(-(t * t)) * gc[2:3, :] * m_att                          # (R, F)
    out_ref[0] = out.astype(out_ref.dtype)


# --------------------------------------------------------------------------- #
# Wrapper
# --------------------------------------------------------------------------- #
def gaussian_neighbor_forward(X, E_idx, mask_atoms, mask_attend, params, *,
                              residue_tile=None, out_dtype=None,
                              gather_dtype=jnp.float32,
                              vmem_budget_bytes=None):
    """Forward pass of DDAffinity's Gaussian_neighbor.

    out_dtype     : None -> params["means"].dtype (torch `.type_as` semantics).
                    jnp.bfloat16 recommended in production: the kernel is HBM
                    writeback bound and bf16 halves the dominant traffic.
    gather_dtype  : jnp.bfloat16 runs the one-hot gathers on the MXU in bf16
                    (3x fewer passes, useful on v5e for large L) at ~1e-3
                    relative coordinate precision loss.
    """
    B, L, A, _ = X.shape
    N = E_idx.shape[2]
    K = params["means"].shape[-1]
    P, P3, F = A * A, 3 * A * A, A * A * K

    if out_dtype is None:
        out_dtype = params["means"].dtype
    out_bpe = jnp.dtype(out_dtype).itemsize

    cap = _vmem_capacity_bytes()
    if vmem_budget_bytes is None:
        vmem_budget_bytes = int(cap * 0.75)   # ~96 MiB on v5e/v6e, ~48 MiB on v7x

    if residue_tile is None:
        tl, est = _auto_tile(B, L, N, A, K, vmem_budget_bytes, out_bpe)
    else:
        tl = residue_tile
        assert _tile_ok(L, N, tl, out_bpe), "bad residue_tile"
        est = _vmem_estimate(L, N, tl, A, K, out_bpe)
    R = tl * N
    vmem_limit = int(min(int(cap * 0.85),
                         max(32 * 1024 * 1024, int(est * 1.25))))

    # ---- host-side layout plumbing & constants ----
    ea, ec, s3, ma, mc, ek = (jnp.asarray(m) for m in _pair_matrices(A, K))

    X_flat = X.reshape(B, L, 3 * A).astype(jnp.float32)
    m_atoms = mask_atoms.astype(jnp.float32)
    # Fused gather source: neighbor-side data pre-expanded to pair space so a
    # single (R, L) x (L, 125) one-hot matmul does gather + ea + ma + mc.
    src_fused = jnp.concatenate(
        [X_flat @ ea, m_atoms @ ma, m_atoms @ mc], axis=-1)              # (B, L, 125)
    # Center-side coords expanded once per residue; replicated to rows in-kernel.
    xc_ec = X_flat @ ec                                                  # (B, L, 75)
    # Per-row inputs merged into one 2-lane array (E_idx exact as f32 for L<2^24).
    rows = jnp.concatenate(
        [E_idx.astype(jnp.float32).reshape(B, L * N, 1),
         mask_attend.astype(jnp.float32).reshape(B, L * N, 1)], axis=-1)  # (B, L*N, 2)

    mul25 = params["mul"].reshape(1, P).astype(jnp.float32)     # Embedding(25,1)
    bias25 = params["bias"].reshape(1, P).astype(jnp.float32)
    aff = jnp.concatenate([mul25, bias25], axis=0)              # (2, P)
    mean = params["means"].reshape(K).astype(jnp.float32)
    std = jnp.abs(params["stds"].reshape(K).astype(jnp.float32)) + 0.01
    gc = jnp.stack([jnp.tile(mean, P),
                    jnp.tile(1.0 / (std * SQRT_2), P),          # -0.5 folded here
                    jnp.tile(1.0 / (SQRT_2PI * std), P)], axis=0)   # (3, F)

    def const_spec(shape):
        return pl.BlockSpec(shape, lambda b, i: (0,) * len(shape))

    kernel = functools.partial(_gbf_kernel, gather_dtype=gather_dtype)

    grid = (B, L // tl)
    out2 = pl.pallas_call(
        kernel,
        out_shape=jax.ShapeDtypeStruct((B, L * N, F), out_dtype),
        grid_spec=pltpu.PrefetchScalarGridSpec(
            num_scalar_prefetch=0,
            grid=grid,
            in_specs=[
                pl.BlockSpec((1, L, 5 * P), lambda b, i: (b, 0, 0)),   # src_fused
                pl.BlockSpec((1, tl, P3), lambda b, i: (b, i, 0)),     # xc_ec
                pl.BlockSpec((1, R, 2), lambda b, i: (b, i, 0)),       # rows
                const_spec((P3, P)),       # s3
                const_spec((2, P)),        # aff (mul / bias)
                const_spec((P, F)),        # ek
                const_spec((3, F)),        # gc (mean / inv_std_half / coef)
            ],
            out_specs=pl.BlockSpec((1, R, F), lambda b, i: (b, i, 0)),
        ),
        compiler_params=pltpu.CompilerParams(
            dimension_semantics=("parallel", "parallel"),
            vmem_limit_bytes=vmem_limit),
    )(src_fused, xc_ec, rows, s3, aff, ek, gc)

    return out2.reshape(B, L, N, F)


# --------------------------------------------------------------------------- #
# Pure-JAX reference (mirror of the PyTorch forward)
# --------------------------------------------------------------------------- #
def gaussian_neighbor_reference(X, E_idx, mask_atoms, mask_attend, params):
    B, L, A, _ = X.shape
    N = E_idx.shape[2]
    K = params["means"].shape[-1]
    Xf = X.reshape(B, L, A * 3)
    idx_flat = E_idx.reshape(B, L * N)
    nbr_x = jnp.take_along_axis(Xf, idx_flat[:, :, None], axis=1).reshape(B, L, N, A, 3)
    nbr_m = jnp.take_along_axis(mask_atoms, idx_flat[:, :, None], axis=1).reshape(B, L, N, A)
    delta = nbr_x[:, :, :, :, None, :] - X[:, :, None, None, :, :]
    D = jnp.sqrt(jnp.sum(delta ** 2, axis=-1))                          # (B,L,N,A,A)
    mul = params["mul"].reshape(A, A)
    bias = params["bias"].reshape(A, A)
    x = mul * D + bias
    mask_new = nbr_m[:, :, :, None, :] * nbr_m[:, :, :, :, None]
    x = x * mask_new
    mean = params["means"].reshape(-1)
    std = jnp.abs(params["stds"].reshape(-1)) + 0.01
    g = jnp.exp(-0.5 * ((x[..., None] - mean) / std) ** 2) / (SQRT_2PI * std)
    return g.reshape(B, L, N, A * A * K) * mask_attend[..., None]


if __name__ == "__main__":
    key = jax.random.PRNGKey(0)
    ks = jax.random.split(key, 8)

    A, K = 5, 16
    # deterministic synthetic parameters (nn.Embedding weights ~ N(0,1))
    params = {
        "means": jax.random.normal(ks[4], (1, K), jnp.float32),      # Embedding(1, K)
        "stds":  jax.random.normal(ks[5], (1, K), jnp.float32),      # Embedding(1, K)
        "mul":   jax.random.normal(ks[6], (A * A, 1), jnp.float32),  # Embedding(25, 1)
        "bias":  jax.random.normal(ks[7], (A * A, 1), jnp.float32),  # Embedding(25, 1)
    }

    def run_case(B, L, N, kidx, residue_tile=None, out_dtype=None):
        kk = jax.random.split(jax.random.fold_in(key, kidx), 4)
        X = jax.random.normal(kk[0], (B, L, A, 3), jnp.float32)
        E_idx = jax.random.randint(kk[1], (B, L, N), 0, L, jnp.int32)
        mask_atoms = (jax.random.uniform(kk[2], (B, L, A)) > 0.2).astype(jnp.float32)
        mask_attend = (jax.random.uniform(kk[3], (B, L, N)) > 0.2).astype(jnp.float32)
        out = gaussian_neighbor_forward(X, E_idx, mask_atoms, mask_attend, params,
                                        residue_tile=residue_tile, out_dtype=out_dtype)
        out = jax.block_until_ready(out)
        ref = gaussian_neighbor_reference(X, E_idx, mask_atoms, mask_attend, params)
        assert out.shape == (B, L, N, A * A * K), out.shape
        out32 = jnp.asarray(out, jnp.float32)
        max_err = float(jnp.max(jnp.abs(out32 - ref)))
        scale = float(jnp.max(jnp.abs(ref))) + 1.0
        rel = 1e-4 if (out_dtype is None or out_dtype == jnp.float32) else 2e-2
        assert max_err <= rel * scale, (max_err, rel * scale)

    # small shapes consistent with the module: 5 atoms / residue, K=16 gaussians
    run_case(B=2, L=8, N=4, kidx=1)                     # single-tile grid per batch
    run_case(B=2, L=16, N=8, kidx=2, residue_tile=8)    # explicit multi-tile grid
    run_case(B=1, L=16, N=4, kidx=3, out_dtype=jnp.bfloat16)  # bf16 writeback, auto >=2 grid steps

    print("KERNEL_OK")
</pallas_src>

<mosaic_0001>
module attributes {stable_mosaic.version = 11 : i64} {
  func.func @_gbf_kernel(%arg0: i32, %arg1: i32, %arg2: memref<1x8x125xf32, #tpu.memory_space<vmem>>, %arg3: memref<1x8x75xf32, #tpu.memory_space<vmem>>, %arg4: memref<1x32x2xf32, #tpu.memory_space<vmem>>, %arg5: memref<75x25xf32, #tpu.memory_space<vmem>>, %arg6: memref<2x25xf32, #tpu.memory_space<vmem>>, %arg7: memref<25x400xf32, #tpu.memory_space<vmem>>, %arg8: memref<3x400xf32, #tpu.memory_space<vmem>>, %arg9: memref<1x32x400xf32, #tpu.memory_space<vmem>>) attributes {dimension_semantics = [#tpu.dimension_semantics<parallel>, #tpu.dimension_semantics<parallel>], iteration_bounds = array<i64: 2, 1>, scalar_prefetch = 0 : i64, scratch_operands = 0 : i64, tpu.core_type = #tpu.core_type<tc>, window_params = [{transform_indices = @transform_0, window_bounds = array<i64: 1, 8, 125>}, {transform_indices = @transform_1, window_bounds = array<i64: 1, 8, 75>}, {transform_indices = @transform_2, window_bounds = array<i64: 1, 32, 2>}, {pipeline_mode = #tpu.pipeline_mode<synchronous>, transform_indices = @transform_3, window_bounds = array<i64: 75, 25>}, {pipeline_mode = #tpu.pipeline_mode<synchronous>, transform_indices = @transform_4, window_bounds = array<i64: 2, 25>}, {pipeline_mode = #tpu.pipeline_mode<synchronous>, transform_indices = @transform_5, window_bounds = array<i64: 25, 400>}, {pipeline_mode = #tpu.pipeline_mode<synchronous>, transform_indices = @transform_6, window_bounds = array<i64: 3, 400>}, {transform_indices = @transform_7, window_bounds = array<i64: 1, 32, 400>}]} {
    %c0 = arith.constant 0 : index
    %c0_0 = arith.constant 0 : index
    %c0_1 = arith.constant 0 : index
    %0 = vector.load %arg2[%c0, %c0_0, %c0_1] : memref<1x8x125xf32, #tpu.memory_space<vmem>>, vector<1x8x125xf32>
    %1 = vector.shape_cast %0 : vector<1x8x125xf32> to vector<8x125xf32>
    %c0_2 = arith.constant 0 : index
    %c0_3 = arith.constant 0 : index
    %c0_4 = arith.constant 0 : index
    %2 = vector.load %arg3[%c0_2, %c0_3, %c0_4] : memref<1x8x75xf32, #tpu.memory_space<vmem>>, vector<1x8x75xf32>
    %3 = vector.shape_cast %2 : vector<1x8x75xf32> to vector<8x75xf32>
    %c0_5 = arith.constant 0 : index
    %c0_6 = arith.constant 0 : index
    %c0_7 = arith.constant 0 : index
    %4 = vector.load %arg4[%c0_5, %c0_6, %c0_7] : memref<1x32x2xf32, #tpu.memory_space<vmem>>, vector<1x32x2xf32>
    %5 = vector.shape_cast %4 : vector<1x32x2xf32> to vector<32x2xf32>
    %6 = vector.extract_strided_slice %5 {offsets = [0, 0], sizes = [32, 1], strides = [1, 1]} : vector<32x2xf32> to vector<32x1xf32>
    %7 = arith.fptosi %6 : vector<32x1xf32> to vector<32x1xi32>
    %8 = vector.extract_strided_slice %5 {offsets = [0, 1], sizes = [32, 1], strides = [1, 1]} : vector<32x2xf32> to vector<32x1xf32>
    %9 = tpu.iota {dimensions = array<i32: 1>} : vector<32x8xi32>
    %10 = vector.broadcast %7 : vector<32x1xi32> to vector<32x8xi32>
    %11 = arith.cmpi eq, %10, %9 : vector<32x8xi32>
    %12 = arith.extui %11 : vector<32x8xi1> to vector<32x8xi32>
    %13 = arith.sitofp %12 : vector<32x8xi32> to vector<32x8xf32>
    %cst = arith.constant dense<0.000000e+00> : vector<32x125xf32>
    %14 = tpu.matmul %13, %1, %cst {dimension_numbers = #tpu.dot_dimension_numbers<[1], [0], [0], [1], [0, 0, 1, 1], [], []>} : vector<32x8xf32>, vector<8x125xf32>, vector<32x125xf32> -> vector<32x125xf32>
    %15 = tpu.iota {dimensions = array<i32: 0>} : vector<32x8xi32>
    %16 = tpu.iota {dimensions = array<i32: 1>} : vector<32x8xi32>
    %c4_i32 = arith.constant 4 : i32
    %17 = vector.broadcast %c4_i32 : i32 to vector<32x8xi32>
    %18 = arith.muli %16, %17 : vector<32x8xi32>
    %19 = arith.cmpi sge, %15, %18 : vector<32x8xi32>
    %c4_i32_8 = arith.constant 4 : i32
    %20 = vector.broadcast %c4_i32_8 : i32 to vector<32x8xi32>
    %21 = arith.addi %18, %20 : vector<32x8xi32>
    %22 = arith.cmpi slt, %15, %21 : vector<32x8xi32>
    %23 = arith.andi %19, %22 : vector<32x8xi1>
    %24 = arith.extui %23 : vector<32x8xi1> to vector<32x8xi32>
    %25 = arith.sitofp %24 : vector<32x8xi32> to vector<32x8xf32>
    %cst_9 = arith.constant dense<0.000000e+00> : vector<32x75xf32>
    %26 = tpu.matmul %25, %3, %cst_9 {dimension_numbers = #tpu.dot_dimension_numbers<[1], [0], [0], [1], [0, 0, 1, 1], [], []>} : vector<32x8xf32>, vector<8x75xf32>, vector<32x75xf32> -> vector<32x75xf32>
    %27 = vector.extract_strided_slice %14 {offsets = [0, 0], sizes = [32, 75], strides = [1, 1]} : vector<32x125xf32> to vector<32x75xf32>
    %28 = arith.subf %27, %26 : vector<32x75xf32>
    %29 = arith.mulf %28, %28 : vector<32x75xf32>
    %c0_10 = arith.constant 0 : index
    %c0_11 = arith.constant 0 : index
    %30 = vector.load %arg5[%c0_10, %c0_11] : memref<75x25xf32, #tpu.memory_space<vmem>>, vector<75x25xf32>
    %cst_12 = arith.constant dense<0.000000e+00> : vector<32x25xf32>
    %31 = tpu.matmul %29, %30, %cst_12 {dimension_numbers = #tpu.dot_dimension_numbers<[1], [0], [0], [1], [0, 0, 1, 1], [], []>} : vector<32x75xf32>, vector<75x25xf32>, vector<32x25xf32> -> vector<32x25xf32>
    %32 = math.sqrt %31 : vector<32x25xf32>
    %33 = vector.extract_strided_slice %14 {offsets = [0, 75], sizes = [32, 25], strides = [1, 1]} : vector<32x125xf32> to vector<32x25xf32>
    %34 = vector.extract_strided_slice %14 {offsets = [0, 100], sizes = [32, 25], strides = [1, 1]} : vector<32x125xf32> to vector<32x25xf32>
    %35 = arith.mulf %33, %34 : vector<32x25xf32>
    %c0_13 = arith.constant 0 : index
    %c0_14 = arith.constant 0 : index
    %36 = vector.load %arg6[%c0_13, %c0_14] : memref<2x25xf32, #tpu.memory_space<vmem>>, vector<2x25xf32>
    %37 = vector.extract_strided_slice %36 {offsets = [0, 0], sizes = [1, 25], strides = [1, 1]} : vector<2x25xf32> to vector<1x25xf32>
    %38 = vector.broadcast %37 : vector<1x25xf32> to vector<32x25xf32>
    %39 = arith.mulf %38, %32 : vector<32x25xf32>
    %40 = vector.extract_strided_slice %36 {offsets = [1, 0], sizes = [1, 25], strides = [1, 1]} : vector<2x25xf32> to vector<1x25xf32>
    %41 = vector.broadcast %40 : vector<1x25xf32> to vector<32x25xf32>
    %42 = arith.addf %39, %41 : vector<32x25xf32>
    %43 = arith.mulf %42, %35 : vector<32x25xf32>
    %c0_15 = arith.constant 0 : index
    %c0_16 = arith.constant 0 : index
    %44 = vector.load %arg7[%c0_15, %c0_16] : memref<25x400xf32, #tpu.memory_space<vmem>>, vector<25x400xf32>
    %cst_17 = arith.constant dense<0.000000e+00> : vector<32x400xf32>
    %45 = tpu.matmul %43, %44, %cst_17 {dimension_numbers = #tpu.dot_dimension_numbers<[1], [0], [0], [1], [0, 0, 1, 1], [], []>} : vector<32x25xf32>, vector<25x400xf32>, vector<32x400xf32> -> vector<32x400xf32>
    %c0_18 = arith.constant 0 : index
    %c0_19 = arith.constant 0 : index
    %46 = vector.load %arg8[%c0_18, %c0_19] : memref<3x400xf32, #tpu.memory_space<vmem>>, vector<3x400xf32>
    %47 = vector.extract_strided_slice %46 {offsets = [0, 0], sizes = [1, 400], strides = [1, 1]} : vector<3x400xf32> to vector<1x400xf32>
    %48 = vector.broadcast %47 : vector<1x400xf32> to vector<32x400xf32>
    %49 = arith.subf %45, %48 : vector<32x400xf32>
    %50 = vector.extract_strided_slice %46 {offsets = [1, 0], sizes = [1, 400], strides = [1, 1]} : vector<3x400xf32> to vector<1x400xf32>
    %51 = vector.broadcast %50 : vector<1x400xf32> to vector<32x400xf32>
    %52 = arith.mulf %49, %51 : vector<32x400xf32>
    %53 = arith.mulf %52, %52 : vector<32x400xf32>
    %cst_20 = arith.constant 0.000000e+00 : f32
    %54 = vector.broadcast %cst_20 : f32 to vector<32x400xf32>
    %55 = arith.subf %54, %53 : vector<32x400xf32>
    %56 = math.exp %55 : vector<32x400xf32>
    %57 = vector.extract_strided_slice %46 {offsets = [2, 0], sizes = [1, 400], strides = [1, 1]} : vector<3x400xf32> to vector<1x400xf32>
    %58 = vector.broadcast %57 : vector<1x400xf32> to vector<32x400xf32>
    %59 = arith.mulf %56, %58 : vector<32x400xf32>
    %60 = vector.broadcast %8 : vector<32x1xf32> to vector<32x400xf32>
    %61 = arith.mulf %59, %60 : vector<32x400xf32>
    %c0_21 = arith.constant 0 : index
    %c0_22 = arith.constant 0 : index
    %c0_23 = arith.constant 0 : index
    %62 = vector.load %arg9[%c0_21, %c0_22, %c0_23] : memref<1x32x400xf32, #tpu.memory_space<vmem>>, vector<1x32x400xf32>
    %63 = vector.shape_cast %62 : vector<1x32x400xf32> to vector<32x400xf32>
    %64 = vector.shape_cast %61 : vector<32x400xf32> to vector<1x32x400xf32>
    tpu.vector_store %arg9[%c0_21, %c0_22, %c0_23], %64 {strides = array<i32>} : memref<1x32x400xf32, #tpu.memory_space<vmem>>, vector<1x32x400xf32>,
    return
  }
  func.func @transform_0(%arg0: i32, %arg1: i32) -> (i32, i32, i32) {
    %c0_i32 = arith.constant 0 : i32
    %c0_i32_0 = arith.constant 0 : i32
    %c0_i32_1 = arith.constant 0 : i32
    return %arg0, %c0_i32, %c0_i32_0 : i32, i32, i32
  }
  func.func @transform_1(%arg0: i32, %arg1: i32) -> (i32, i32, i32) {
    %c0_i32 = arith.constant 0 : i32
    %c0_i32_0 = arith.constant 0 : i32
    return %arg0, %arg1, %c0_i32 : i32, i32, i32
  }
  func.func @transform_2(%arg0: i32, %arg1: i32) -> (i32, i32, i32) {
    %c0_i32 = arith.constant 0 : i32
    %c0_i32_0 = arith.constant 0 : i32
    return %arg0, %arg1, %c0_i32 : i32, i32, i32
  }
  func.func @transform_3(%arg0: i32, %arg1: i32) -> (i32, i32) {
    %c0_i32 = arith.constant 0 : i32
    %c0_i32_0 = arith.constant 0 : i32
    %c0_i32_1 = arith.constant 0 : i32
    return %c0_i32, %c0_i32_0 : i32, i32
  }
  func.func @transform_4(%arg0: i32, %arg1: i32) -> (i32, i32) {
    %c0_i32 = arith.constant 0 : i32
    %c0_i32_0 = arith.constant 0 : i32
    %c0_i32_1 = arith.constant 0 : i32
    return %c0_i32, %c0_i32_0 : i32, i32
  }
  func.func @transform_5(%arg0: i32, %arg1: i32) -> (i32, i32) {
    %c0_i32 = arith.constant 0 : i32
    %c0_i32_0 = arith.constant 0 : i32
    %c0_i32_1 = arith.constant 0 : i32
    return %c0_i32, %c0_i32_0 : i32, i32
  }
  func.func @transform_6(%arg0: i32, %arg1: i32) -> (i32, i32) {
    %c0_i32 = arith.constant 0 : i32
    %c0_i32_0 = arith.constant 0 : i32
    %c0_i32_1 = arith.constant 0 : i32
    return %c0_i32, %c0_i32_0 : i32, i32
  }
  func.func @transform_7(%arg0: i32, %arg1: i32) -> (i32, i32, i32) {
    %c0_i32 = arith.constant 0 : i32
    %c0_i32_0 = arith.constant 0 : i32
    return %arg0, %arg1, %c0_i32 : i32, i32, i32
  }
}

</mosaic_0001>

<llo_original>
// kernel: tpu_custom_call.1
$region0: #{tpu_custom_call.1}
  #allocation0 [shape = 'u32[]', space=smem, size = 0x4, offset = 0x4, fixed_abs, tag = 'smem constant byte address 0x4 - core index']
  #allocation1 [shape = 'u32[72,128]{1,0:T(1,128)}', space=vmem, size = 0x9000, scoped, tag = 'internal scratch']
  %s0 = inlined_call_operand.vmem [shape: f32[2,8,125], index: 0, kind: input, shape index: {}]
  %s1 = inlined_call_operand.hbm [shape: f32[2,8,75], index: 1, kind: input, shape index: {}]
  %s2 = inlined_call_operand.vmem [shape: f32[2,32,2], index: 2, kind: input, shape index: {}]
  %s3 = inlined_call_operand.vmem [shape: f32[75,25], index: 3, kind: input, shape index: {}]
  %s4 = inlined_call_operand.vmem [shape: f32[2,25], index: 4, kind: input, shape index: {}]
  %s5 = inlined_call_operand.vmem [shape: f32[25,400], index: 5, kind: input, shape index: {}]
  %s6 = inlined_call_operand.hbm [shape: f32[3,400], index: 6, kind: input, shape index: {}]
  %s7 = inlined_call_operand.hbm [shape: f32[2,32,400], index: 7, kind: output, shape index: {}]
  %s8 = sld [smem:[#allocation0]]
  $region69: #{tpu_custom_call.1} parent=0
    _
  %s10 = ssub.s32 1, %s8
  %s11 = scalar_select 0, %s10, %s8
  $region1: #{tpu_custom_call.1} parent=0
    #allocation2 [shape = 'u8[8192]{0}', space=vmem, size = 0x2000, scoped, tag = 'input window, operand 1']
    #allocation3 [shape = 's32[2]{0}', space=sflag, size = 0x8, scoped, tag = 'scoped memory for tpu_custom_call.1']
    #allocation4 [shape = 's32[2]{0}', space=sflag, size = 0x8, scoped, tag = 'scoped memory for tpu_custom_call.1']
    #allocation5 [shape = 'u8[8192]{0}', space=vmem, size = 0x2000, scoped, tag = 'input window, operand 6, single buffered']
    #allocation6 [shape = 's32[1]{0}', space=sflag, size = 0x4, scoped, tag = 'scoped memory for tpu_custom_call.1']
    #allocation7 [shape = 'u8[131072]{0}', space=vmem, size = 0x20000, scoped, tag = 'output window, operand 0']
    %12 = vsyncpa [#allocation3], 0
    %s13 = scalar_lea.sflag [#allocation3], 1
    %14 = vsyncpa %s13, 0
    %15 = vsyncpa [#allocation6], 0
    %16 = vsyncpa [#allocation4], 0
    %s17 = scalar_lea.sflag [#allocation4], 1
    %18 = vsyncpa %s17, 0
    loop: start=0, step=1, limit=4
    $region2: #{tpu_custom_call.1} parent=1 // loop_pre_header
      _
    $region3: #{tpu_custom_call.1} parent=1 // loop_header
      %s20 = sphi 0, %s24
      %p21 = scmp.ge.s32.totalorder %s20, 4
      %s27 = sphi 0, %s39
      %s28 = sphi 0, %s35
      %s29 = sphi 0, %s27
      %s30 = sphi 0, %s28
      %s31 = sphi 0, %s29
      %s32 = sphi 0, %s30
      %s42 = sphi 0, %s44
      %s45 = sphi 0, %s42
      %s46 = sphi 0, %s45
      %s62 = sphi 0, %s46
      %s70 = sphi 0, %s72
      %s73 = sphi 0, %s70
      %s74 = sphi 0, %s73
      %s90 = sphi 0, %s74
      %s98 = sphi 0, %s100
      %s101 = sphi 0, %s98
      %s102 = sphi 0, %s101
      %s118 = sphi 0, %s102
      %s122 = sphi 0, %s122
      %s124 = sphi 0, %s122
      %s125 = sphi 0, %s124
      %s139 = sphi 0, %s125
      %s143 = sphi 0, %s143
      %s145 = sphi 0, %s143
      %s146 = sphi 0, %s145
      %s160 = sphi 0, %s146
      %s164 = sphi 0, %s164
      %s166 = sphi 0, %s164
      %s167 = sphi 0, %s166
      %s181 = sphi 0, %s167
      %s185 = sphi 0, %s185
      %s187 = sphi 0, %s185
      %s188 = sphi 0, %s187
      %s202 = sphi 0, %s188
      %s210 = sphi 0, %s212
      %s213 = sphi 0, %s210
      %s214 = sphi 0, %s213
      %s230 = sphi 0, %s214
    $region4: #{tpu_custom_call.1} parent=1 // loop_header_branch
      %23 = sbr.rel (%p21) target = $region8
    $region5: #{tpu_custom_call.1} parent=1 // loop_body
      %s25 = ssub.s32 %s20, 1
      %s26 = ssub.s32 %s20, 2
      %s33 = sadd.s32 1, %s28
      %p34 = scmp.ge.s32.totalorder %s33, 1
      %s35 = scalar_select %p34, 0, %s33
      %s36 = sadd.s32 1, %s27
      %s37 = scalar_select %p34, %s36, %s27
      %p38 = scmp.ge.s32.totalorder %s37, 2
      %s39 = scalar_select %p38, 0, %s37
      %s40 = ssub.s32 %s27, %s39
      %p41 = scmp.eq.s32.totalorder %s40, 0
      %s43 = sadd.s32 %s42, 1
      %s44 = scalar_select %p41, %s42, %s43
      %p47 = pneg %p41
      %p48 = scmp.eq.s32.totalorder %s20, 1
      %p49 = por %p47, %p48
      %p50 = scmp.ne.s32.totalorder %s42, %s45
      %p51 = scmp.eq.s32.totalorder %s20, 0
      %p52 = por %p50, %p51
      %p53 = scmp.ne.s32.totalorder %s42, %s45
      %p54 = scmp.eq.s32.totalorder %s25, 1
      %p55 = por %p53, %p54
      %p56 = scmp.ne.s32.totalorder %s45, %s46
      %p57 = scmp.eq.s32.totalorder %s25, 0
      %p58 = por %p56, %p57
      %p59 = scmp.ne.s32.totalorder %s45, %s46
      %p60 = scmp.eq.s32.totalorder %s26, 1
      %p61 = por %p59, %p60
      %p63 = scmp.ne.s32.totalorder %s46, %s62
      %p64 = scmp.eq.s32.totalorder %s26, 0
      %p65 = por %p63, %p64
      %s66 = ssub.s32 %s27, %s39
      %s67 = ssub.s32 %s28, %s35
      %s68 = sor.u32 %s66, %s67
      %p69 = scmp.eq.s32.totalorder %s68, 0
      %s71 = sadd.s32 %s70, 1
      %s72 = scalar_select %p69, %s70, %s71
      %p75 = pneg %p69
      %p76 = scmp.eq.s32.totalorder %s20, 1
      %p77 = por %p75, %p76
      %p78 = scmp.ne.s32.totalorder %s70, %s73
      %p79 = scmp.eq.s32.totalorder %s20, 0
      %p80 = por %p78, %p79
      %p81 = scmp.ne.s32.totalorder %s70, %s73
      %p82 = scmp.eq.s32.totalorder %s25, 1
      %p83 = por %p81, %p82
      %p84 = scmp.ne.s32.totalorder %s73, %s74
      %p85 = scmp.eq.s32.totalorder %s25, 0
      %p86 = por %p84, %p85
      %p87 = scmp.ne.s32.totalorder %s73, %s74
      %p88 = scmp.eq.s32.totalorder %s26, 1
      %p89 = por %p87, %p88
      %p91 = scmp.ne.s32.totalorder %s74, %s90
      %p92 = scmp.eq.s32.totalorder %s26, 0
      %p93 = por %p91, %p92
      %s94 = ssub.s32 %s27, %s39
      %s95 = ssub.s32 %s28, %s35
      %s96 = sor.u32 %s94, %s95
      %p97 = scmp.eq.s32.totalorder %s96, 0
      %s99 = sadd.s32 %s98, 1
      %s100 = scalar_select %p97, %s98, %s99
      %p103 = pneg %p97
      %p104 = scmp.eq.s32.totalorder %s20, 1
      %p105 = por %p103, %p104
      %p106 = scmp.ne.s32.totalorder %s98, %s101
      %p107 = scmp.eq.s32.totalorder %s20, 0
      %p108 = por %p106, %p107
      %p109 = scmp.ne.s32.totalorder %s98, %s101
      %p110 = scmp.eq.s32.totalorder %s25, 1
      %p111 = por %p109, %p110
      %p112 = scmp.ne.s32.totalorder %s101, %s102
      %p113 = scmp.eq.s32.totalorder %s25, 0
      %p114 = por %p112, %p113
      %p115 = scmp.ne.s32.totalorder %s101, %s102
      %p116 = scmp.eq.s32.totalorder %s26, 1
      %p117 = por %p115, %p116
      %p119 = scmp.ne.s32.totalorder %s102, %s118
      %p120 = scmp.eq.s32.totalorder %s26, 0
      %p121 = por %p119, %p120
      %s123 = sadd.s32 %s122, 1
      %p126 = scmp.eq.s32.totalorder %s20, 1
      %p127 = scmp.ne.s32.totalorder %s122, %s124
      %p128 = scmp.eq.s32.totalorder %s20, 0
      %p129 = por %p127, %p128
      %p130 = scmp.ne.s32.totalorder %s122, %s124
      %p131 = scmp.eq.s32.totalorder %s25, 1
      %p132 = por %p130, %p131
      %p133 = scmp.ne.s32.totalorder %s124, %s125
      %p134 = scmp.eq.s32.totalorder %s25, 0
      %p135 = por %p133, %p134
      %p136 = scmp.ne.s32.totalorder %s124, %s125
      %p137 = scmp.eq.s32.totalorder %s26, 1
      %p138 = por %p136, %p137
      %p140 = scmp.ne.s32.totalorder %s125, %s139
      %p141 = scmp.eq.s32.totalorder %s26, 0
      %p142 = por %p140, %p141
      %s144 = sadd.s32 %s143, 1
      %p147 = scmp.eq.s32.totalorder %s20, 1
      %p148 = scmp.ne.s32.totalorder %s143, %s145
      %p149 = scmp.eq.s32.totalorder %s20, 0
      %p150 = por %p148, %p149
      %p151 = scmp.ne.s32.totalorder %s143, %s145
      %p152 = scmp.eq.s32.totalorder %s25, 1
      %p153 = por %p151, %p152
      %p154 = scmp.ne.s32.totalorder %s145, %s146
      %p155 = scmp.eq.s32.totalorder %s25, 0
      %p156 = por %p154, %p155
      %p157 = scmp.ne.s32.totalorder %s145, %s146
      %p158 = scmp.eq.s32.totalorder %s26, 1
      %p159 = por %p157, %p158
      %p161 = scmp.ne.s32.totalorder %s146, %s160
      %p162 = scmp.eq.s32.totalorder %s26, 0
      %p163 = por %p161, %p162
      %s165 = sadd.s32 %s164, 1
      %p168 = scmp.eq.s32.totalorder %s20, 1
      %p169 = scmp.ne.s32.totalorder %s164, %s166
      %p170 = scmp.eq.s32.totalorder %s20, 0
      %p171 = por %p169, %p170
      %p172 = scmp.ne.s32.totalorder %s164, %s166
      %p173 = scmp.eq.s32.totalorder %s25, 1
      %p174 = por %p172, %p173
      %p175 = scmp.ne.s32.totalorder %s166, %s167
      %p176 = scmp.eq.s32.totalorder %s25, 0
      %p177 = por %p175, %p176
      %p178 = scmp.ne.s32.totalorder %s166, %s167
      %p179 = scmp.eq.s32.totalorder %s26, 1
      %p180 = por %p178, %p179
      %p182 = scmp.ne.s32.totalorder %s167, %s181
      %p183 = scmp.eq.s32.totalorder %s26, 0
      %p184 = por %p182, %p183
      %s186 = sadd.s32 %s185, 1
      %p189 = scmp.eq.s32.totalorder %s20, 1
      %p190 = scmp.ne.s32.totalorder %s185, %s187
      %p191 = scmp.eq.s32.totalorder %s20, 0
      %p192 = por %p190, %p191
      %p193 = scmp.ne.s32.totalorder %s185, %s187
      %p194 = scmp.eq.s32.totalorder %s25, 1
      %p195 = por %p193, %p194
      %p196 = scmp.ne.s32.totalorder %s187, %s188
      %p197 = scmp.eq.s32.totalorder %s25, 0
      %p198 = por %p196, %p197
      %p199 = scmp.ne.s32.totalorder %s187, %s188
      %p200 = scmp.eq.s32.totalorder %s26, 1
      %p201 = por %p199, %p200
      %p203 = scmp.ne.s32.totalorder %s188, %s202
      %p204 = scmp.eq.s32.totalorder %s26, 0
      %p205 = por %p203, %p204
      %s206 = ssub.s32 %s27, %s39
      %s207 = ssub.s32 %s28, %s35
      %s208 = sor.u32 %s206, %s207
      %p209 = scmp.eq.s32.totalorder %s208, 0
      %s211 = sadd.s32 %s210, 1
      %s212 = scalar_select %p209, %s210, %s211
      %p215 = pneg %p209
      %p216 = scmp.eq.s32.totalorder %s20, 1
      %p217 = por %p215, %p216
      %p218 = scmp.ne.s32.totalorder %s210, %s213
      %p219 = scmp.eq.s32.totalorder %s20, 0
      %p220 = por %p218, %p219
      %p221 = scmp.ne.s32.totalorder %s210, %s213
      %p222 = scmp.eq.s32.totalorder %s25, 1
      %p223 = por %p221, %p222
      %p224 = scmp.ne.s32.totalorder %s213, %s214
      %p225 = scmp.eq.s32.totalorder %s25, 0
      %p226 = por %p224, %p225
      %p227 = scmp.ne.s32.totalorder %s213, %s214
      %p228 = scmp.eq.s32.totalorder %s26, 1
      %p229 = por %p227, %p228
      %p231 = scmp.ne.s32.totalorder %s214, %s230
      %p232 = scmp.eq.s32.totalorder %s26, 0
      %p233 = por %p231, %p232
      %p234 = scmp.le.s32.totalorder 1, %s20
      %p235 = scmp.lt.s32.totalorder %s20, 3
      %p236 = pnand %p234, %p235
      %p237 = pneg %p236
      // Predicated region
      $region9: #{tpu_custom_call.1} parent=5 // pred_check
        _
      $region10: #{tpu_custom_call.1} parent=5 // pred_check_branch
        %239 = sbr.rel (%p236) target = $region12
      $region11: #{tpu_custom_call.1} parent=5 // pred_region
        %s240 = ssub.s32 %s20, 1
        // Predicated region
        $region13: #{tpu_custom_call.1} parent=11 // pred_check
          %p241 = pneg %p135
        $region14: #{tpu_custom_call.1} parent=11 // pred_check_branch
          %243 = sbr.rel (%p241) target = $region16
        $region15: #{tpu_custom_call.1} parent=11 // pred_region
          _
        $region16: #{tpu_custom_call.1} parent=11 // pred_fallthru
          _
        // Predicated region
        $region17: #{tpu_custom_call.1} parent=11 // pred_check
          %p244 = pneg %p156
        $region18: #{tpu_custom_call.1} parent=11 // pred_check_branch
          %246 = sbr.rel (%p244) target = $region20
        $region19: #{tpu_custom_call.1} parent=11 // pred_region
          _
        $region20: #{tpu_custom_call.1} parent=11 // pred_fallthru
          _
        // Predicated region
        $region21: #{tpu_custom_call.1} parent=11 // pred_check
          %p247 = pneg %p177
        $region22: #{tpu_custom_call.1} parent=11 // pred_check_branch
          %249 = sbr.rel (%p247) target = $region24
        $region23: #{tpu_custom_call.1} parent=11 // pred_region
          _
        $region24: #{tpu_custom_call.1} parent=11 // pred_fallthru
          _
        // Predicated region
        $region25: #{tpu_custom_call.1} parent=11 // pred_check
          %p250 = pneg %p198
        $region26: #{tpu_custom_call.1} parent=11 // pred_check_branch
          %252 = sbr.rel (%p250) target = $region28
        $region27: #{tpu_custom_call.1} parent=11 // pred_region
          %254 = vsyncadd [#allocation6], 0
          %s256 = sshll.u32 %s6, 4
          %s257 = int_to_ptr.hbm [resolvable:$true] %s256
          %s258 = sshll.u32 [#allocation5], 4
          %s259 = int_to_ptr.vmem [resolvable:$true] %s258
          %261 = dma.hbm_to_vmem [thread:$0]  %s257, 256, %s259, [#allocation6]
        $region28: #{tpu_custom_call.1} parent=11 // pred_fallthru
          _
      $region12: #{tpu_custom_call.1} parent=5 // pred_fallthru
        _
      %p262 = scmp.lt.s32.totalorder %s20, 2
      // Predicated region
      $region29: #{tpu_custom_call.1} parent=5 // pred_check
        %p263 = pneg %p262
      $region30: #{tpu_custom_call.1} parent=5 // pred_check_branch
        %265 = sbr.rel (%p263) target = $region32
      $region31: #{tpu_custom_call.1} parent=5 // pred_region
        // Predicated region
        $region33: #{tpu_custom_call.1} parent=31 // pred_check
          %p266 = pneg %p52
        $region34: #{tpu_custom_call.1} parent=31 // pred_check_branch
          %268 = sbr.rel (%p266) target = $region36
        $region35: #{tpu_custom_call.1} parent=31 // pred_region
          %p269 = scmp.lt.s32.totalorder %s27, 1
          %s270 = scalar_select %p269, %s27, 1
          %s271 = smul.addr %s270, 8
          %s272 = scalar_lea.vmem %s0, %s271
        $region36: #{tpu_custom_call.1} parent=31 // pred_fallthru
          _
        // Predicated region
        $region37: #{tpu_custom_call.1} parent=31 // pred_check
          %p273 = pneg %p80
        $region38: #{tpu_custom_call.1} parent=31 // pred_check_branch
          %275 = sbr.rel (%p273) target = $region40
        $region39: #{tpu_custom_call.1} parent=31 // pred_region
          %s276 = sand.u32 %s70, 1
          %s277 = scalar_lea.sflag [#allocation3], %s276
          %s278 = sand.u32 %s70, 1
          %s279 = smul.addr %s278, 8
          %s280 = scalar_lea.vmem [#allocation2], %s279
          %282 = vsyncadd %s277, 0
          %s283 = sadd.s32 %s28, %s27
          %s284 = smul.addr %s283, 8
          %s285 = scalar_lea.hbm %s1, %s284
          %s287 = sshll.u32 %s285, 4
          %s288 = int_to_ptr.hbm [resolvable:$true] %s287
          %s289 = sshll.u32 %s280, 4
          %s290 = int_to_ptr.vmem [resolvable:$true] %s289
          %292 = dma.hbm_to_vmem [thread:$0]  %s288, 128, %s290, %s277
        $region40: #{tpu_custom_call.1} parent=31 // pred_fallthru
          _
        // Predicated region
        $region41: #{tpu_custom_call.1} parent=31 // pred_check
          %p293 = pneg %p108
        $region42: #{tpu_custom_call.1} parent=31 // pred_check_branch
          %295 = sbr.rel (%p293) target = $region44
        $region43: #{tpu_custom_call.1} parent=31 // pred_region
          %s296 = smul.u32 4, %s28
          %p297 = scmp.lt.s32.totalorder %s27, 1
          %s298 = scalar_select %p297, %s27, 1
          %p299 = scmp.lt.s32.totalorder %s296, 3
          %s300 = scalar_select %p299, %s296, 3
          %s301 = smul.addr %s298, 4
          %s302 = sadd.s32 %s300, %s301
          %s303 = smul.addr %s302, 8
          %s304 = scalar_lea.vmem %s2, %s303
          %s305 = smul.u32 4, %s28
        $region44: #{tpu_custom_call.1} parent=31 // pred_fallthru
          _
      $region32: #{tpu_custom_call.1} parent=5 // pred_fallthru
        _
      %p306 = scmp.le.s32.totalorder 1, %s20
      %p307 = scmp.lt.s32.totalorder %s20, 3
      %p308 = pnand %p306, %p307
      %p309 = pneg %p308
      // Predicated region
      $region45: #{tpu_custom_call.1} parent=5 // pred_check
        _
      $region46: #{tpu_custom_call.1} parent=5 // pred_check_branch
        %311 = sbr.rel (%p308) target = $region48
      $region47: #{tpu_custom_call.1} parent=5 // pred_region
        %s312 = ssub.s32 %s20, 1
        %s313 = sand.u32 %s73, 1
        %s314 = scalar_lea.sflag [#allocation3], %s313
        %s315 = sand.u32 %s73, 1
        %s316 = smul.addr %s315, 8
        %s317 = scalar_lea.vmem [#allocation2], %s316
        // Predicated region
        $region49: #{tpu_custom_call.1} parent=47 // pred_check
          %p318 = pneg %p86
        $region50: #{tpu_custom_call.1} parent=47 // pred_check_branch
          %320 = sbr.rel (%p318) target = $region52
        $region51: #{tpu_custom_call.1} parent=47 // pred_region
          %322 = dma.done %s314, 128
        $region52: #{tpu_custom_call.1} parent=47 // pred_fallthru
          _
        // Predicated region
        $region53: #{tpu_custom_call.1} parent=47 // pred_check
          %p323 = pneg %p198
        $region54: #{tpu_custom_call.1} parent=47 // pred_check_branch
          %325 = sbr.rel (%p323) target = $region56
        $region55: #{tpu_custom_call.1} parent=47 // pred_region
          %327 = dma.done [#allocation6], 256
        $region56: #{tpu_custom_call.1} parent=47 // pred_fallthru
          _
        %p328 = scmp.lt.s32.totalorder %s29, 1
        %s329 = scalar_select %p328, %s29, 1
        %s330 = smul.addr %s329, 8
        %s331 = scalar_lea.vmem %s0, %s330
        %p332 = pneg %p58
        %p333 = pneg %p55
        %s334 = sand.u32 %s73, 1
        %s335 = scalar_lea.sflag [#allocation3], %s334
        %s336 = sand.u32 %s73, 1
        %s337 = smul.addr %s336, 8
        %s338 = scalar_lea.vmem [#allocation2], %s337
        %p339 = pneg %p86
        %p340 = pneg %p83
        %s341 = smul.u32 4, %s30
        %p342 = scmp.lt.s32.totalorder %s29, 1
        %s343 = scalar_select %p342, %s29, 1
        %p344 = scmp.lt.s32.totalorder %s341, 3
        %s345 = scalar_select %p344, %s341, 3
        %s346 = smul.addr %s343, 4
        %s347 = sadd.s32 %s345, %s346
        %s348 = smul.addr %s347, 8
        %s349 = scalar_lea.vmem %s2, %s348
        %p350 = pneg %p114
        %p351 = pneg %p111
        %p352 = pneg %p135
        %p353 = pneg %p132
        %p354 = pneg %p156
        %p355 = pneg %p153
        %p356 = pneg %p177
        %p357 = pneg %p174
        %p358 = pneg %p198
        %p359 = pneg %p195
        %p360 = pneg %p226
        %p361 = pneg %p223
        %s362 = sand.u32 %s213, 1
        %s363 = scalar_lea.sflag [#allocation4], %s362
        %s364 = sand.u32 %s213, 1
        %s365 = smul.addr %s364, 128
        %s366 = scalar_lea.vmem [#allocation7], %s365
        %p367 = scmp.lt.s32.totalorder %s29, 1
        %s368 = scalar_select %p367, %s29, 1
        %s369 = smul.addr %s368, 8
        %s370 = scalar_lea.vmem %s0, %s369
        %s371 = smul.u32 4, %s30
        %p372 = scmp.lt.s32.totalorder %s29, 1
        %s373 = scalar_select %p372, %s29, 1
        %p374 = scmp.lt.s32.totalorder %s371, 3
        %s375 = scalar_select %p374, %s371, 3
        %s376 = smul.addr %s373, 4
        %s377 = sadd.s32 %s375, %s376
        %s378 = smul.addr %s377, 8
        %s379 = scalar_lea.vmem %s2, %s378
        %s380 = smul.u32 4, %s30
        %s381 = smul.u32 4, %s30
        %v382 = vld [vmem:[%s370] sm:$0xff]
        %v383 = vld [vmem:[%s317] sm:$0xff]
        %v384 = vld [vmem:[%s379] sm:$0xff]
        %v385 = vld [vmem:[%s379 + $0x8] sm:$0xff]
        %v386 = vld [vmem:[%s379 + $0x10] sm:$0xff]
        %v387 = vld [vmem:[%s379 + $0x18] sm:$0xff]
        %v388 = vcvt.f32.s32.to.zero.pseudo %v384
        %v389 = vcvt.f32.s32.to.zero.pseudo %v385
        %v390 = vcvt.f32.s32.to.zero.pseudo %v386
        %v391 = vcvt.f32.s32.to.zero.pseudo %v387
        %v392 = vlaneseq
        %v393 = vand.u32 %v392, 127
        %394 = vset.pattern.permute.xlu0 0
        %395 = vperm.xlu0 %394, %v388
        %v396 = vpop.permute.xlu0 %395
        %397 = vset.pattern.permute.xlu0 0
        %398 = vperm.xlu0 %397, %v389
        %v399 = vpop.permute.xlu0 %398
        %400 = vset.pattern.permute.xlu0 0
        %401 = vperm.xlu0 %400, %v390
        %v402 = vpop.permute.xlu0 %401
        %403 = vset.pattern.permute.xlu0 0
        %404 = vperm.xlu0 %403, %v391
        %v405 = vpop.permute.xlu0 %404
        %vm406 = vcmp.eq.s32.totalorder %v396, %v393
        %vm407 = vcmp.eq.s32.totalorder %v399, %v393
        %vm408 = vcmp.eq.s32.totalorder %v402, %v393
        %vm409 = vcmp.eq.s32.totalorder %v405, %v393
        %v410 = vsel %vm406, 1, 0
        %v411 = vsel %vm407, 1, 0
        %v412 = vsel %vm408, 1, 0
        %v413 = vsel %vm409, 1, 0
        %v414 = vcvt.s32.f32 %v410
        %v415 = vcvt.s32.f32 %v411
        %v416 = vcvt.s32.f32 %v412
        %v417 = vcvt.s32.f32 %v413
        %vm418 = vcmask 64512
        %v420 = vsel %vm418, %v414, 0
        %v423 = vsel %vm418, %v415, 0
        %v426 = vsel %vm418, %v416, 0
        %v429 = vsel %vm418, %v417, 0
        %431 = vmatpush.msra.mxu0 0.0
        %432 = vmatpush.msra.mxu0 0.0
        %433 = vmatpush.msra.mxu0 0.0
        %434 = vmatpush.msra.mxu0 0.0
        %435 = vmatpush.msra.mxu0 0.0
        %436 = vmatpush.msra.mxu0 0.0
        %437 = vmatpush.msra.mxu0 0.0
        %438 = vmatpush.msra.mxu0 0.0
        %439 = vmatpush.msra.mxu0 0.0
        %440 = vmatpush.msra.mxu0 0.0
        %441 = vmatpush.msra.mxu0 0.0
        %442 = vmatpush.msra.mxu0 0.0
        %443 = vmatpush.msra.mxu0 0.0
        %444 = vmatpush.msra.mxu0 0.0
        %445 = vmatpush.msra.mxu0 0.0
        %446 = vmatpush.msra.mxu0 %v382
        %447 = vmatmul.f32.gmra.mxu0 %v420
        %v448 = vpop.f32.mrf.mxu0
        %v449 = vadd.f32 0.0, %v448
        %450 = vmatmul.f32.gmra.mxu0 %v423
        %v451 = vpop.f32.mrf.mxu0
        %v452 = vadd.f32 0.0, %v451
        %453 = vmatmul.f32.gmra.mxu0 %v426
        %v454 = vpop.f32.mrf.mxu0
        %v455 = vadd.f32 0.0, %v454
        %456 = vmatmul.f32.gmra.mxu0 %v429
        %v457 = vpop.f32.mrf.mxu0
        %v458 = vadd.f32 0.0, %v457
        %459 = vdwg.mxu0
        %v460 = vlaneseq
        %v461 = vshrl.u32 %v460, 7
        %v462 = vadd.s32 %v461, 8
        %v463 = vadd.s32 %v461, 16
        %v464 = vadd.s32 %v461, 24
        %v465 = vmul.u32 %v393, 4
        %vm466 = vcmp.ge.s32.totalorder %v461, %v465
        %vm467 = vcmp.ge.s32.totalorder %v462, %v465
        %vm468 = vcmp.ge.s32.totalorder %v463, %v465
        %vm469 = vcmp.ge.s32.totalorder %v464, %v465
        %v470 = vadd.s32 %v465, 4
        %vm471 = vcmp.lt.s32.totalorder %v461, %v470
        %vm472 = vcmp.lt.s32.totalorder %v462, %v470
        %vm473 = vcmp.lt.s32.totalorder %v463, %v470
        %vm474 = vcmp.lt.s32.totalorder %v464, %v470
        %vm475 = vmand %vm466, %vm471
        %vm476 = vmand %vm467, %vm472
        %vm477 = vmand %vm468, %vm473
        %vm478 = vmand %vm469, %vm474
        %v479 = vsel %vm475, 1, 0
        %v480 = vsel %vm476, 1, 0
        %v481 = vsel %vm477, 1, 0
        %v482 = vsel %vm478, 1, 0
        %v483 = vcvt.s32.f32 %v479
        %v484 = vcvt.s32.f32 %v480
        %v485 = vcvt.s32.f32 %v481
        %v486 = vcvt.s32.f32 %v482
        %v488 = vsel %vm418, %v483, 0
        %v491 = vsel %vm418, %v484, 0
        %v494 = vsel %vm418, %v485, 0
        %v497 = vsel %vm418, %v486, 0
        %499 = vmatpush.msra.mxu0 0.0
        %500 = vmatpush.msra.mxu0 0.0
        %501 = vmatpush.msra.mxu0 0.0
        %502 = vmatpush.msra.mxu0 0.0
        %503 = vmatpush.msra.mxu0 0.0
        %504 = vmatpush.msra.mxu0 0.0
        %505 = vmatpush.msra.mxu0 0.0
        %506 = vmatpush.msra.mxu0 0.0
        %507 = vmatpush.msra.mxu0 0.0
        %508 = vmatpush.msra.mxu0 0.0
        %509 = vmatpush.msra.mxu0 0.0
        %510 = vmatpush.msra.mxu0 0.0
        %511 = vmatpush.msra.mxu0 0.0
        %512 = vmatpush.msra.mxu0 0.0
        %513 = vmatpush.msra.mxu0 0.0
        %514 = vmatpush.msra.mxu0 %v383
        %515 = vmatmul.f32.gmra.mxu0 %v488
        %v516 = vpop.f32.mrf.mxu0
        %v517 = vadd.f32 0.0, %v516
        %518 = vmatmul.f32.gmra.mxu0 %v491
        %v519 = vpop.f32.mrf.mxu0
        %v520 = vadd.f32 0.0, %v519
        %521 = vmatmul.f32.gmra.mxu0 %v494
        %v522 = vpop.f32.mrf.mxu0
        %v523 = vadd.f32 0.0, %v522
        %524 = vmatmul.f32.gmra.mxu0 %v497
        %v525 = vpop.f32.mrf.mxu0
        %v526 = vadd.f32 0.0, %v525
        %527 = vdwg.mxu0
        %v528 = vsub.f32 %v449, %v517
        %v529 = vsub.f32 %v452, %v520
        %v530 = vsub.f32 %v455, %v523
        %v531 = vsub.f32 %v458, %v526
        %v532 = vmul.f32 %v528, %v528
        %v533 = vmul.f32 %v529, %v529
        %v534 = vmul.f32 %v530, %v530
        %v535 = vmul.f32 %v531, %v531
        %v536 = vld [vmem:[%s3] sm:$0xff]
        %v537 = vld [vmem:[%s3 + $0x8] sm:$0xff]
        %v538 = vld [vmem:[%s3 + $0x10] sm:$0xff]
        %v539 = vld [vmem:[%s3 + $0x18] sm:$0xff]
        %v540 = vld [vmem:[%s3 + $0x20] sm:$0xff]
        %v541 = vld [vmem:[%s3 + $0x28] sm:$0xff]
        %v542 = vld [vmem:[%s3 + $0x30] sm:$0xff]
        %v543 = vld [vmem:[%s3 + $0x38] sm:$0xff]
        %v544 = vld [vmem:[%s3 + $0x40] sm:$0xff]
        %v545 = vld [vmem:[%s3 + $0x48] sm:$0x7]
        %vm546 = vcmask 613376
        %v548 = vsel %vm546, %v532, 0
        %v551 = vsel %vm546, %v533, 0
        %v554 = vsel %vm546, %v534, 0
        %v557 = vsel %vm546, %v535, 0
        %vm559 = vcmask 1042432
        %v561 = vsel %vm559, %v545, 0
        %563 = vmatpush.msra.mxu0 0.0
        %564 = vmatpush.msra.mxu0 0.0
        %565 = vmatpush.msra.mxu0 0.0
        %566 = vmatpush.msra.mxu0 0.0
        %567 = vmatpush.msra.mxu0 0.0
        %568 = vmatpush.msra.mxu0 0.0
        %569 = vmatpush.msra.mxu0 %v561
        %570 = vmatpush.msra.mxu0 %v544
        %571 = vmatpush.msra.mxu0 %v543
        %572 = vmatpush.msra.mxu0 %v542
        %573 = vmatpush.msra.mxu0 %v541
        %574 = vmatpush.msra.mxu0 %v540
        %575 = vmatpush.msra.mxu0 %v539
        %576 = vmatpush.msra.mxu0 %v538
        %577 = vmatpush.msra.mxu0 %v537
        %578 = vmatpush.msra.mxu0 %v536
        %579 = vmatmul.f32.gmra.mxu0 %v548
        %v580 = vpop.f32.mrf.mxu0
        %v581 = vadd.f32 0.0, %v580
        %582 = vmatmul.f32.gmra.mxu0 %v551
        %v583 = vpop.f32.mrf.mxu0
        %v584 = vadd.f32 0.0, %v583
        %585 = vmatmul.f32.gmra.mxu0 %v554
        %v586 = vpop.f32.mrf.mxu0
        %v587 = vadd.f32 0.0, %v586
        %588 = vmatmul.f32.gmra.mxu0 %v557
        %v589 = vpop.f32.mrf.mxu0
        %v590 = vadd.f32 0.0, %v589
        %591 = vdwg.mxu0
        %v592 = vrsqrt.pop %v581
        %v593 = vmul.f32 %v592, %v581
        %v594 = vmul.f32 %v593, %v592
        %v595 = vmul.f32 0.5, %v594
        %v596 = vsub.f32 1.5, %v595
        %v597 = vmul.f32 %v592, %v596
        %v598 = vmul.f32 %v581, %v597
        %vm599 = vcmp.eq.f32.partialorder %v581, inf
        %v600 = vsel %vm599, %v581, %v598
        %vm601 = vcmp.eq.f32.partialorder %v581, 0.0
        %v602 = vand.u32 %v581, 2147483648
        %v603 = vsel %vm601, %v602, %v600
        %v604 = vrsqrt.pop %v584
        %v605 = vmul.f32 %v604, %v584
        %v606 = vmul.f32 %v605, %v604
        %v607 = vmul.f32 0.5, %v606
        %v608 = vsub.f32 1.5, %v607
        %v609 = vmul.f32 %v604, %v608
        %v610 = vmul.f32 %v584, %v609
        %vm611 = vcmp.eq.f32.partialorder %v584, inf
        %v612 = vsel %vm611, %v584, %v610
        %vm613 = vcmp.eq.f32.partialorder %v584, 0.0
        %v614 = vand.u32 %v584, 2147483648
        %v615 = vsel %vm613, %v614, %v612
        %v616 = vrsqrt.pop %v587
        %v617 = vmul.f32 %v616, %v587
        %v618 = vmul.f32 %v617, %v616
        %v619 = vmul.f32 0.5, %v618
        %v620 = vsub.f32 1.5, %v619
        %v621 = vmul.f32 %v616, %v620
        %v622 = vmul.f32 %v587, %v621
        %vm623 = vcmp.eq.f32.partialorder %v587, inf
        %v624 = vsel %vm623, %v587, %v622
        %vm625 = vcmp.eq.f32.partialorder %v587, 0.0
        %v626 = vand.u32 %v587, 2147483648
        %v627 = vsel %vm625, %v626, %v624
        %v628 = vrsqrt.pop %v590
        %v629 = vmul.f32 %v628, %v590
        %v630 = vmul.f32 %v629, %v628
        %v631 = vmul.f32 0.5, %v630
        %v632 = vsub.f32 1.5, %v631
        %v633 = vmul.f32 %v628, %v632
        %v634 = vmul.f32 %v590, %v633
        %vm635 = vcmp.eq.f32.partialorder %v590, inf
        %v636 = vsel %vm635, %v590, %v634
        %vm637 = vcmp.eq.f32.partialorder %v590, 0.0
        %v638 = vand.u32 %v590, 2147483648
        %v639 = vsel %vm637, %v638, %v636
        %644 = vrot.lane.b32.xlu0 %v449, 103
        %v645 = vpop.permute.xlu0 %644
        %646 = vrot.lane.b32.xlu0 %v452, 103
        %v647 = vpop.permute.xlu0 %646
        %648 = vrot.lane.b32.xlu0 %v455, 103
        %v649 = vpop.permute.xlu0 %648
        %650 = vrot.lane.b32.xlu0 %v458, 103
        %v651 = vpop.permute.xlu0 %650
        %v656 = vmul.f32 %v449, %v645
        %v657 = vmul.f32 %v452, %v647
        %v658 = vmul.f32 %v455, %v649
        %v659 = vmul.f32 %v458, %v651
        %v660 = vld [vmem:[%s4] sm:$0x3]
        %v661 = vperm.slane %v660, 0
        %v662 = vmul.f32 %v661, %v603
        %v663 = vmul.f32 %v661, %v615
        %v664 = vmul.f32 %v661, %v627
        %v665 = vmul.f32 %v661, %v639
        %v666 = vperm.slane %v660, 1
        %v667 = vadd.f32 %v662, %v666
        %v668 = vadd.f32 %v663, %v666
        %v669 = vadd.f32 %v664, %v666
        %v670 = vadd.f32 %v665, %v666
        %675 = vrot.lane.b32.xlu0 %v656, 53
        %v676 = vpop.permute.xlu0 %675
        %677 = vrot.lane.b32.xlu0 %v657, 53
        %v678 = vpop.permute.xlu0 %677
        %679 = vrot.lane.b32.xlu0 %v658, 53
        %v680 = vpop.permute.xlu0 %679
        %681 = vrot.lane.b32.xlu0 %v659, 53
        %v682 = vpop.permute.xlu0 %681
        %v687 = vmul.f32 %v667, %v676
        %v688 = vmul.f32 %v668, %v678
        %v689 = vmul.f32 %v669, %v680
        %v690 = vmul.f32 %v670, %v682
        %v691 = vld [vmem:[%s5] sm:$0xff]
        %v692 = vld [vmem:[%s5 + $0x8] sm:$0xff]
        %v693 = vld [vmem:[%s5 + $0x10] sm:$0xff]
        %v694 = vld [vmem:[%s5 + $0x18] sm:$0xff]
        %v695 = vld [vmem:[%s5 + $0x20] sm:$0xff]
        %v696 = vld [vmem:[%s5 + $0x28] sm:$0xff]
        %v697 = vld [vmem:[%s5 + $0x30] sm:$0xff]
        %v698 = vld [vmem:[%s5 + $0x38] sm:$0xff]
        %v699 = vld [vmem:[%s5 + $0x40] sm:$0xff]
        %v700 = vld [vmem:[%s5 + $0x48] sm:$0xff]
        %v701 = vld [vmem:[%s5 + $0x50] sm:$0xff]
        %v702 = vld [vmem:[%s5 + $0x58] sm:$0xff]
        %v703 = vld [vmem:[%s5 + $0x60] sm:$0x1]
        %v704 = vld [vmem:[%s5 + $0x68] sm:$0x1]
        %v705 = vld [vmem:[%s5 + $0x70] sm:$0x1]
        %v706 = vld [vmem:[%s5 + $0x78] sm:$0x1]
        %vm707 = vcmask 203776
        %v709 = vsel %vm707, %v687, 0
        %v712 = vsel %vm707, %v688, 0
        %v715 = vsel %vm707, %v689, 0
        %v718 = vsel %vm707, %v690, 0
        %vm720 = vcmask 1040384
        %v722 = vsel %vm720, %v703, 0
        %v725 = vsel %vm720, %v704, 0
        %v728 = vsel %vm720, %v705, 0
        %v731 = vsel %vm720, %v706, 0
        %733 = vmatpush.msra.mxu0 0.0
        %734 = vmatpush.msra.mxu0 0.0
        %735 = vmatpush.msra.mxu0 0.0
        %736 = vmatpush.msra.mxu0 0.0
        %737 = vmatpush.msra.mxu0 0.0
        %738 = vmatpush.msra.mxu0 0.0
        %739 = vmatpush.msra.mxu0 0.0
        %740 = vmatpush.msra.mxu0 0.0
        %741 = vmatpush.msra.mxu0 0.0
        %742 = vmatpush.msra.mxu0 0.0
        %743 = vmatpush.msra.mxu0 0.0
        %744 = vmatpush.msra.mxu0 0.0
        %745 = vmatpush.msra.mxu0 %v722
        %746 = vmatpush.msra.mxu0 %v699
        %747 = vmatpush.msra.mxu0 %v695
        %748 = vmatpush.msra.mxu0 %v691
        %749 = vmatmul.f32.gmra.mxu0 %v709
        %v750 = vpop.f32.mrf.mxu0
        %v751 = vadd.f32 0.0, %v750
        %752 = vmatmul.f32.gmra.mxu0 %v712
        %v753 = vpop.f32.mrf.mxu0
        %v754 = vadd.f32 0.0, %v753
        %755 = vmatmul.f32.gmra.mxu0 %v715
        %v756 = vpop.f32.mrf.mxu0
        %v757 = vadd.f32 0.0, %v756
        %758 = vmatmul.f32.gmra.mxu0 %v718
        %v759 = vpop.f32.mrf.mxu0
        %v760 = vadd.f32 0.0, %v759
        %761 = vdwg.mxu0
        %762 = vmatpush.msra.mxu0 0.0
        %763 = vmatpush.msra.mxu0 0.0
        %764 = vmatpush.msra.mxu0 0.0
        %765 = vmatpush.msra.mxu0 0.0
        %766 = vmatpush.msra.mxu0 0.0
        %767 = vmatpush.msra.mxu0 0.0
        %768 = vmatpush.msra.mxu0 0.0
        %769 = vmatpush.msra.mxu0 0.0
        %770 = vmatpush.msra.mxu0 0.0
        %771 = vmatpush.msra.mxu0 0.0
        %772 = vmatpush.msra.mxu0 0.0
        %773 = vmatpush.msra.mxu0 0.0
        %774 = vmatpush.msra.mxu0 %v725
        %775 = vmatpush.msra.mxu0 %v700
        %776 = vmatpush.msra.mxu0 %v696
        %777 = vmatpush.msra.mxu0 %v692
        %778 = vmatmul.f32.gmra.mxu0 %v709
        %v779 = vpop.f32.mrf.mxu0
        %v780 = vadd.f32 0.0, %v779
        %781 = vmatmul.f32.gmra.mxu0 %v712
        %v782 = vpop.f32.mrf.mxu0
        %v783 = vadd.f32 0.0, %v782
        %784 = vmatmul.f32.gmra.mxu0 %v715
        %v785 = vpop.f32.mrf.mxu0
        %v786 = vadd.f32 0.0, %v785
        %787 = vmatmul.f32.gmra.mxu0 %v718
        %v788 = vpop.f32.mrf.mxu0
        %v789 = vadd.f32 0.0, %v788
        %790 = vdwg.mxu0
        %791 = vmatpush.msra.mxu0 0.0
        %792 = vmatpush.msra.mxu0 0.0
        %793 = vmatpush.msra.mxu0 0.0
        %794 = vmatpush.msra.mxu0 0.0
        %795 = vmatpush.msra.mxu0 0.0
        %796 = vmatpush.msra.mxu0 0.0
        %797 = vmatpush.msra.mxu0 0.0
        %798 = vmatpush.msra.mxu0 0.0
        %799 = vmatpush.msra.mxu0 0.0
        %800 = vmatpush.msra.mxu0 0.0
        %801 = vmatpush.msra.mxu0 0.0
        %802 = vmatpush.msra.mxu0 0.0
        %803 = vmatpush.msra.mxu0 %v728
        %804 = vmatpush.msra.mxu0 %v701
        %805 = vmatpush.msra.mxu0 %v697
        %806 = vmatpush.msra.mxu0 %v693
        %807 = vmatmul.f32.gmra.mxu0 %v709
        %v808 = vpop.f32.mrf.mxu0
        %v809 = vadd.f32 0.0, %v808
        %810 = vmatmul.f32.gmra.mxu0 %v712
        %v811 = vpop.f32.mrf.mxu0
        %v812 = vadd.f32 0.0, %v811
        %813 = vmatmul.f32.gmra.mxu0 %v715
        %v814 = vpop.f32.mrf.mxu0
        %v815 = vadd.f32 0.0, %v814
        %816 = vmatmul.f32.gmra.mxu0 %v718
        %v817 = vpop.f32.mrf.mxu0
        %v818 = vadd.f32 0.0, %v817
        %819 = vdwg.mxu0
        %820 = vmatpush.msra.mxu0 0.0
        %821 = vmatpush.msra.mxu0 0.0
        %822 = vmatpush.msra.mxu0 0.0
        %823 = vmatpush.msra.mxu0 0.0
        %824 = vmatpush.msra.mxu0 0.0
        %825 = vmatpush.msra.mxu0 0.0
        %826 = vmatpush.msra.mxu0 0.0
        %827 = vmatpush.msra.mxu0 0.0
        %828 = vmatpush.msra.mxu0 0.0
        %829 = vmatpush.msra.mxu0 0.0
        %830 = vmatpush.msra.mxu0 0.0
        %831 = vmatpush.msra.mxu0 0.0
        %832 = vmatpush.msra.mxu0 %v731
        %833 = vmatpush.msra.mxu0 %v702
        %834 = vmatpush.msra.mxu0 %v698
        %835 = vmatpush.msra.mxu0 %v694
        %836 = vmatmul.f32.gmra.mxu0 %v709
        %v837 = vpop.f32.mrf.mxu0
        %v838 = vadd.f32 0.0, %v837
        %839 = vmatmul.f32.gmra.mxu0 %v712
        %v840 = vpop.f32.mrf.mxu0
        %v841 = vadd.f32 0.0, %v840
        %842 = vmatmul.f32.gmra.mxu0 %v715
        %v843 = vpop.f32.mrf.mxu0
        %v844 = vadd.f32 0.0, %v843
        %845 = vmatmul.f32.gmra.mxu0 %v718
        %v846 = vpop.f32.mrf.mxu0
        %v847 = vadd.f32 0.0, %v846
        %848 = vdwg.mxu0
        %v849 = vld [vmem:[#allocation5] sm:$0x77]
        %v850 = vld [vmem:[#allocation5 + $0x8] sm:$0x77]
        %v853 = vperm.slane %v849, 0
        %v854 = vperm.slane %v849, 4
        %v855 = vperm.slane %v850, 0
        %v856 = vperm.slane %v850, 4
        %v861 = vperm.slane %v853, 0
        %v862 = vperm.slane %v854, 0
        %v863 = vperm.slane %v855, 0
        %v864 = vperm.slane %v856, 0
        %v865 = vsub.f32 %v751, %v861
        %v866 = vsub.f32 %v780, %v862
        %v867 = vsub.f32 %v809, %v863
        %v868 = vsub.f32 %v838, %v864
        %v869 = vsub.f32 %v754, %v861
        %v870 = vsub.f32 %v783, %v862
        %v871 = vsub.f32 %v812, %v863
        %v872 = vsub.f32 %v841, %v864
        %v873 = vsub.f32 %v757, %v861
        %v874 = vsub.f32 %v786, %v862
        %v875 = vsub.f32 %v815, %v863
        %v876 = vsub.f32 %v844, %v864
        %v877 = vsub.f32 %v760, %v861
        %v878 = vsub.f32 %v789, %v862
        %v879 = vsub.f32 %v818, %v863
        %v880 = vsub.f32 %v847, %v864
        %v881 = vperm.slane %v849, 1
        %v882 = vperm.slane %v849, 5
        %v883 = vperm.slane %v850, 1
        %v884 = vperm.slane %v850, 5
        %v889 = vperm.slane %v881, 1
        %v890 = vperm.slane %v882, 1
        %v891 = vperm.slane %v883, 1
        %v892 = vperm.slane %v884, 1
        %v893 = vmul.f32 %v865, %v889
        %v894 = vmul.f32 %v866, %v890
        %v895 = vmul.f32 %v867, %v891
        %v896 = vmul.f32 %v868, %v892
        %v897 = vmul.f32 %v869, %v889
        %v898 = vmul.f32 %v870, %v890
        %v899 = vmul.f32 %v871, %v891
        %v900 = vmul.f32 %v872, %v892
        %v901 = vmul.f32 %v873, %v889
        %v902 = vmul.f32 %v874, %v890
        %v903 = vmul.f32 %v875, %v891
        %v904 = vmul.f32 %v876, %v892
        %v905 = vmul.f32 %v877, %v889
        %v906 = vmul.f32 %v878, %v890
        %v907 = vmul.f32 %v879, %v891
        %v908 = vmul.f32 %v880, %v892
        %v909 = vmul.f32 %v893, %v893
        %v910 = vmul.f32 %v894, %v894
        %v911 = vmul.f32 %v895, %v895
        %v912 = vmul.f32 %v896, %v896
        %v913 = vmul.f32 %v897, %v897
        %v914 = vmul.f32 %v898, %v898
        %v915 = vmul.f32 %v899, %v899
        %v916 = vmul.f32 %v900, %v900
        %v917 = vmul.f32 %v901, %v901
        %v918 = vmul.f32 %v902, %v902
        %v919 = vmul.f32 %v903, %v903
        %v920 = vmul.f32 %v904, %v904
        %v921 = vmul.f32 %v905, %v905
        %v922 = vmul.f32 %v906, %v906
        %v923 = vmul.f32 %v907, %v907
        %v924 = vmul.f32 %v908, %v908
        %v925 = vsub.f32 0.0, %v909
        %v926 = vsub.f32 0.0, %v910
        %v927 = vsub.f32 0.0, %v911
        %v928 = vsub.f32 0.0, %v912
        %v929 = vsub.f32 0.0, %v913
        %v930 = vsub.f32 0.0, %v914
        %v931 = vsub.f32 0.0, %v915
        %v932 = vsub.f32 0.0, %v916
        %v933 = vsub.f32 0.0, %v917
        %v934 = vsub.f32 0.0, %v918
        %v935 = vsub.f32 0.0, %v919
        %v936 = vsub.f32 0.0, %v920
        %v937 = vsub.f32 0.0, %v921
        %v938 = vsub.f32 0.0, %v922
        %v939 = vsub.f32 0.0, %v923
        %v940 = vsub.f32 0.0, %v924
        %v941 = vmul.f32 %v925, 1.442695
        %v942 = vpow.pop %v941
        %v943 = vmul.f32 %v926, 1.442695
        %v944 = vpow.pop %v943
        %v945 = vmul.f32 %v927, 1.442695
        %v946 = vpow.pop %v945
        %v947 = vmul.f32 %v928, 1.442695
        %v948 = vpow.pop %v947
        %v949 = vmul.f32 %v929, 1.442695
        %v950 = vpow.pop %v949
        %v951 = vmul.f32 %v930, 1.442695
        %v952 = vpow.pop %v951
        %v953 = vmul.f32 %v931, 1.442695
        %v954 = vpow.pop %v953
        %v955 = vmul.f32 %v932, 1.442695
        %v956 = vpow.pop %v955
        %v957 = vmul.f32 %v933, 1.442695
        %v958 = vpow.pop %v957
        %v959 = vmul.f32 %v934, 1.442695
        %v960 = vpow.pop %v959
        %v961 = vmul.f32 %v935, 1.442695
        %v962 = vpow.pop %v961
        %v963 = vmul.f32 %v936, 1.442695
        %v964 = vpow.pop %v963
        %v965 = vmul.f32 %v937, 1.442695
        %v966 = vpow.pop %v965
        %v967 = vmul.f32 %v938, 1.442695
        %v968 = vpow.pop %v967
        %v969 = vmul.f32 %v939, 1.442695
        %v970 = vpow.pop %v969
        %v971 = vmul.f32 %v940, 1.442695
        %v972 = vpow.pop %v971
        %v973 = vperm.slane %v849, 2
        %v974 = vperm.slane %v849, 6
        %v975 = vperm.slane %v850, 2
        %v976 = vperm.slane %v850, 6
        %v981 = vperm.slane %v973, 2
        %v982 = vperm.slane %v974, 2
        %v983 = vperm.slane %v975, 2
        %v984 = vperm.slane %v976, 2
        %v985 = vmul.f32 %v942, %v981
        %v986 = vmul.f32 %v944, %v982
        %v987 = vmul.f32 %v946, %v983
        %v988 = vmul.f32 %v948, %v984
        %v989 = vmul.f32 %v950, %v981
        %v990 = vmul.f32 %v952, %v982
        %v991 = vmul.f32 %v954, %v983
        %v992 = vmul.f32 %v956, %v984
        %v993 = vmul.f32 %v958, %v981
        %v994 = vmul.f32 %v960, %v982
        %v995 = vmul.f32 %v962, %v983
        %v996 = vmul.f32 %v964, %v984
        %v997 = vmul.f32 %v966, %v981
        %v998 = vmul.f32 %v968, %v982
        %v999 = vmul.f32 %v970, %v983
        %v1000 = vmul.f32 %v972, %v984
        %1002 = vset.pattern.permute.xlu0 1
        %1003 = vperm.xlu0 %1002, %v384
        %v1004 = vpop.permute.xlu0 %1003
        %1007 = vset.pattern.permute.xlu0 1
        %1008 = vperm.xlu0 %1007, %v385
        %v1009 = vpop.permute.xlu0 %1008
        %1012 = vset.pattern.permute.xlu0 1
        %1013 = vperm.xlu0 %1012, %v386
        %v1014 = vpop.permute.xlu0 %1013
        %1017 = vset.pattern.permute.xlu0 1
        %1018 = vperm.xlu0 %1017, %v387
        %v1019 = vpop.permute.xlu0 %1018
        %v1021 = vmul.f32 %v985, %v1004
        %v1022 = vmul.f32 %v986, %v1004
        %v1023 = vmul.f32 %v987, %v1004
        %v1024 = vmul.f32 %v988, %v1004
        %v1025 = vmul.f32 %v989, %v1009
        %v1026 = vmul.f32 %v990, %v1009
        %v1027 = vmul.f32 %v991, %v1009
        %v1028 = vmul.f32 %v992, %v1009
        %v1029 = vmul.f32 %v993, %v1014
        %v1030 = vmul.f32 %v994, %v1014
        %v1031 = vmul.f32 %v995, %v1014
        %v1032 = vmul.f32 %v996, %v1014
        %v1033 = vmul.f32 %v997, %v1019
        %v1034 = vmul.f32 %v998, %v1019
        %v1035 = vmul.f32 %v999, %v1019
        %v1036 = vmul.f32 %v1000, %v1019
        %1037 = vst [vmem:[%s366] sm:$0xff] %v1021
        %1038 = vst [vmem:[%s366 + $0x8] sm:$0xff] %v1022
        %1039 = vst [vmem:[%s366 + $0x10] sm:$0xff] %v1023
        %vm1040 = vcmask 130048
        %1041 = vst.msk [vmem:[%s366 + $0x18] sm:$0xff] %vm1040, %v1024
        %1042 = vst [vmem:[%s366 + $0x20] sm:$0xff] %v1025
        %1043 = vst [vmem:[%s366 + $0x28] sm:$0xff] %v1026
        %1044 = vst [vmem:[%s366 + $0x30] sm:$0xff] %v1027
        %1045 = vst.msk [vmem:[%s366 + $0x38] sm:$0xff] %vm1040, %v1028
        %1046 = vst [vmem:[%s366 + $0x40] sm:$0xff] %v1029
        %1047 = vst [vmem:[%s366 + $0x48] sm:$0xff] %v1030
        %1048 = vst [vmem:[%s366 + $0x50] sm:$0xff] %v1031
        %1049 = vst.msk [vmem:[%s366 + $0x58] sm:$0xff] %vm1040, %v1032
        %1050 = vst [vmem:[%s366 + $0x60] sm:$0xff] %v1033
        %1051 = vst [vmem:[%s366 + $0x68] sm:$0xff] %v1034
        %1052 = vst [vmem:[%s366 + $0x70] sm:$0xff] %v1035
        %1053 = vst.msk [vmem:[%s366 + $0x78] sm:$0xff] %vm1040, %v1036
        %s1054 = sand.u32 %s213, 1
        %s1055 = scalar_lea.sflag [#allocation4], %s1054
        %s1056 = sand.u32 %s213, 1
        %s1057 = smul.addr %s1056, 128
        %s1058 = scalar_lea.vmem [#allocation7], %s1057
        // Predicated region
        $region57: #{tpu_custom_call.1} parent=47 // pred_check
          %p1059 = pneg %p223
        $region58: #{tpu_custom_call.1} parent=47 // pred_check_branch
          %1061 = sbr.rel (%p1059) target = $region60
        $region59: #{tpu_custom_call.1} parent=47 // pred_region
          %s1062 = smul.u32 4, %s30
          %1064 = vsyncadd %s1055, 0
          %s1065 = smul.addr %s1062, 4
          %s1066 = smul.addr %s29, 16
          %s1067 = sadd.s32 %s1065, %s1066
          %s1068 = smul.addr %s1067, 8
          %s1069 = scalar_lea.hbm %s7, %s1068
          %s1070 = sshll.u32 %s1058, 4
          %s1071 = int_to_ptr.vmem [resolvable:$true] %s1070
          %s1072 = sshll.u32 %s1069, 4
          %s1073 = int_to_ptr.hbm [resolvable:$true] %s1072
          %1078 = dma.vmem_to_hbm [thread:$0]  %s1071, 2048, %s1073, %s1055, 512, 512, 32
        $region60: #{tpu_custom_call.1} parent=47 // pred_fallthru
          _
      $region48: #{tpu_custom_call.1} parent=5 // pred_fallthru
        _
      %p1079 = scmp.le.s32.totalorder 2, %s20
      // Predicated region
      $region61: #{tpu_custom_call.1} parent=5 // pred_check
        %p1080 = pneg %p1079
      $region62: #{tpu_custom_call.1} parent=5 // pred_check_branch
        %1082 = sbr.rel (%p1080) target = $region64
      $region63: #{tpu_custom_call.1} parent=5 // pred_region
        %s1083 = ssub.s32 %s20, 2
        // Predicated region
        $region65: #{tpu_custom_call.1} parent=63 // pred_check
          %p1084 = pneg %p229
        $region66: #{tpu_custom_call.1} parent=63 // pred_check_branch
          %1086 = sbr.rel (%p1084) target = $region68
        $region67: #{tpu_custom_call.1} parent=63 // pred_region
          %s1087 = sand.u32 %s214, 1
          %s1088 = scalar_lea.sflag [#allocation4], %s1087
          %s1089 = sand.u32 %s214, 1
          %s1090 = smul.addr %s1089, 128
          %s1091 = scalar_lea.vmem [#allocation7], %s1090
          %1093 = dma.done %s1088, 2048
        $region68: #{tpu_custom_call.1} parent=63 // pred_fallthru
          _
      $region64: #{tpu_custom_call.1} parent=5 // pred_fallthru
        _
    $region6: #{tpu_custom_call.1} parent=1 // loop_footer
      %s24 = sadd.s32 1, %s20
    $region7: #{tpu_custom_call.1} parent=1 // loop_footer_branch
      %19 = sbr.rel target = $region3
    $region8: #{tpu_custom_call.1} parent=1 // loop_exit
      _
    %1094 = vsyncpa [#allocation3], 1
    %s1095 = scalar_lea.sflag [#allocation3], 1
    %1096 = vsyncpa %s1095, 1
    %1097 = vsyncpa [#allocation6], 1
    %1098 = vsyncpa [#allocation4], 1
    %s1099 = scalar_lea.sflag [#allocation4], 1
    %1100 = vsyncpa %s1099, 1

</llo_original>
